<compile_context>
chip_gen: v6e
topology: v6e:2x2x1
jax: 0.10.0
libtpu: 0.0.40
codegen_flags: <defaults>
</compile_context>

<pallas_src>
import functools

import jax
import jax.numpy as jnp
from jax.experimental import pallas as pl
from jax.experimental.pallas import tpu as pltpu


def _round_up(x, m):
    return (x + m - 1) // m * m


# ----------------------------------------------------------------------------
# One-time capability / hardware queries (cached, off the hot path)
# ----------------------------------------------------------------------------
@functools.lru_cache(maxsize=None)
def _single_buffer_supported():
    """Detect pl.Buffered(1) support once by compiling a tiny dummy kernel."""
    if not hasattr(pl, "Buffered"):
        return False
    try:
        def _copy(x_ref, o_ref):
            o_ref[...] = x_ref[...]

        fn = pl.pallas_call(
            _copy,
            out_shape=jax.ShapeDtypeStruct((8, 128), jnp.float32),
            grid=(2,),
            in_specs=[pl.BlockSpec((8, 128), lambda i: (0, 0),
                                   pipeline_mode=pl.Buffered(1))],
            out_specs=pl.BlockSpec((8, 128), lambda i: (0, 0)),
        )
        jax.jit(fn).lower(jax.ShapeDtypeStruct((8, 128), jnp.float32)).compile()
        return True
    except Exception:
        return False


@functools.lru_cache(maxsize=None)
def _vmem_capacity():
    """Per-core VMEM bytes; conservative 64 MiB (v7x) if the query fails."""
    try:
        return int(pltpu.get_tpu_info().vmem_capacity_bytes)
    except Exception:
        return 64 * 1024 * 1024


# ----------------------------------------------------------------------------
# Pallas kernels: fused fc6 -> relu -> fc7 -> relu
# ----------------------------------------------------------------------------
def _mlp_kernel_resident(x_ref, w6_ref, b6_ref, w7_ref, b7_ref, o_ref):
    # Full-K dot: w6 stays VMEM-resident across all proposal tiles.
    h = jnp.dot(x_ref[...], w6_ref[...], preferred_element_type=jnp.float32)
    h = jnp.maximum(h + b6_ref[...], 0.0)                       # relu(fc6)
    y = jnp.dot(h.astype(jnp.bfloat16), w7_ref[...],
                preferred_element_type=jnp.float32)
    o_ref[...] = jnp.maximum(y + b7_ref[...], 0.0).astype(o_ref.dtype)


def _mlp_kernel_ktiled(x_ref, w6_ref, b6_ref, w7_ref, b7_ref, o_ref, acc_ref):
    k = pl.program_id(1)

    @pl.when(k == 0)
    def _():
        # Init with the fc6 bias so the epilogue skips a broadcast+add.
        acc_ref[...] = jnp.broadcast_to(b6_ref[...], acc_ref.shape)

    acc_ref[...] += jnp.dot(x_ref[...], w6_ref[...],
                            preferred_element_type=jnp.float32)

    @pl.when(k == pl.num_programs(1) - 1)
    def _():
        h = jnp.maximum(acc_ref[...], 0.0)                      # relu(fc6)
        y = jnp.dot(h.astype(jnp.bfloat16), w7_ref[...],
                    preferred_element_type=jnp.float32)
        o_ref[...] = jnp.maximum(y + b7_ref[...], 0.0).astype(o_ref.dtype)


# ----------------------------------------------------------------------------
# Host-side planning + wrapper
# ----------------------------------------------------------------------------
def prepare_mlp_params(w6, b6, w7, b7, *, k_align=256, n_align=256):
    """One-time (model init) padding + bf16 cast of the fc6/fc7 parameters.

    w6: (mlp_dim, input_size), w7: (mlp_dim, mlp_dim)  -- PyTorch (out, in).
    Padding is 256-aligned for the 2x256x256 MXU on v6e/v7x (harmless on v5e).
    """
    dh, din = w6.shape
    din_p = _round_up(din, k_align)
    dh_p = _round_up(dh, n_align)
    w6_p = jnp.zeros((din_p, dh_p), jnp.bfloat16)
    w6_p = w6_p.at[:din, :dh].set(jnp.asarray(w6).T.astype(jnp.bfloat16))
    w7_p = jnp.zeros((dh_p, dh_p), jnp.bfloat16)
    w7_p = w7_p.at[:dh, :dh].set(jnp.asarray(w7).T.astype(jnp.bfloat16))
    b6_p = jnp.zeros((1, dh_p), jnp.float32).at[0, :dh].set(
        jnp.asarray(b6).astype(jnp.float32))
    b7_p = jnp.zeros((1, dh_p), jnp.float32).at[0, :dh].set(
        jnp.asarray(b7).astype(jnp.float32))
    return dict(w6_p=w6_p, b6_p=b6_p, w7_p=w7_p, b7_p=b7_p,
                din=din, dh=dh, din_p=din_p, dh_p=dh_p)


def _pick_tile_r(R):
    # >=2 proposal tiles for larger R (keeps both v7x TensorCores busy via the
    # "parallel" grid axis); tiles are sublane-aligned (multiple of 8).
    return int(max(8, min(256, _round_up((R + 1) // 2, 8))))


def _working_set_bytes(variant, tile_r, tile_k, din_p, dh_p, weight_buf):
    base = (weight_buf * dh_p * dh_p * 2        # resident w7 (bf16)
            + 2 * weight_buf * dh_p * 4         # b6 + b7 (f32, tiny)
            + 2 * tile_r * dh_p * 4)            # out tile (f32, double-buffered)
    if variant == "resident":
        return (base
                + 2 * tile_r * din_p * 2        # x tile (bf16, double-buffered)
                + weight_buf * din_p * dh_p * 2)  # full w6 resident (bf16)
    return (base
            + 2 * tile_r * tile_k * 2           # x K-tile (double-buffered)
            + 2 * tile_k * dh_p * 2             # w6 K-tile (double-buffered)
            + tile_r * dh_p * 4)                # f32 accumulator scratch


def _plan_mlp(din_p, dh_p, tile_r, weight_buf):
    """Pick variant + tile_k from the actual per-generation VMEM budget."""
    budget = int(_vmem_capacity() * 0.8)
    if _working_set_bytes("resident", tile_r, None, din_p, dh_p,
                          weight_buf) <= budget:
        return "resident", None
    for tk in (2048, 1792, 1536, 1280, 1024, 768, 512, 256, 128):
        if tk <= din_p and din_p % tk == 0 and _working_set_bytes(
                "ktiled", tile_r, tk, din_p, dh_p, weight_buf) <= budget:
            return "ktiled", tk
    return "ktiled", 128 if din_p % 128 == 0 else din_p


def mlp_head_pallas(x_pad, params, *, tile_r, out_dtype=jnp.float32,
                    variant=None, tile_k=None):
    """Fused two-layer MLP head on pre-padded bf16 activations/weights.

    x_pad: (r_p, din_p) bf16, already zero-padded; params from
    prepare_mlp_params. Returns (r_p, dh_p) out_dtype (padded).
    """
    r_p, din_p = x_pad.shape
    dh_p = params["dh_p"]
    assert din_p == params["din_p"] and r_p % tile_r == 0

    weight_buf = 1 if _single_buffer_supported() else 2
    auto_variant, auto_tk = _plan_mlp(din_p, dh_p, tile_r, weight_buf)
    variant = variant or auto_variant
    if variant == "ktiled":
        tile_k = tile_k or auto_tk or (128 if din_p % 128 == 0 else din_p)
        assert din_p % tile_k == 0

    working = _working_set_bytes(variant, tile_r, tile_k, din_p, dh_p,
                                 weight_buf)
    vmem_limit = int(min(_vmem_capacity(), max(32 << 20, working + (16 << 20))))

    # Constant-index weights/biases stay resident for the whole grid; single-
    # buffer them (when supported) to reclaim VMEM on v7x's 64 MiB.
    resident_kw = (dict(pipeline_mode=pl.Buffered(1))
                   if weight_buf == 1 else {})

    if variant == "resident":
        grid = (r_p // tile_r,)
        in_specs = [
            pl.BlockSpec((tile_r, din_p), lambda i: (i, 0)),                 # x
            pl.BlockSpec((din_p, dh_p), lambda i: (0, 0), **resident_kw),    # w6
            pl.BlockSpec((1, dh_p), lambda i: (0, 0), **resident_kw),        # b6
            pl.BlockSpec((dh_p, dh_p), lambda i: (0, 0), **resident_kw),     # w7
            pl.BlockSpec((1, dh_p), lambda i: (0, 0), **resident_kw),        # b7
        ]
        out_specs = pl.BlockSpec((tile_r, dh_p), lambda i: (i, 0))
        kernel, scratch = _mlp_kernel_resident, []
        dims = ("parallel",)
    else:
        grid = (r_p // tile_r, din_p // tile_k)
        in_specs = [
            pl.BlockSpec((tile_r, tile_k), lambda i, k: (i, k)),             # x
            pl.BlockSpec((tile_k, dh_p), lambda i, k: (k, 0)),               # w6
            pl.BlockSpec((1, dh_p), lambda i, k: (0, 0), **resident_kw),     # b6
            pl.BlockSpec((dh_p, dh_p), lambda i, k: (0, 0), **resident_kw),  # w7
            pl.BlockSpec((1, dh_p), lambda i, k: (0, 0), **resident_kw),     # b7
        ]
        out_specs = pl.BlockSpec((tile_r, dh_p), lambda i, k: (i, 0))
        kernel = _mlp_kernel_ktiled
        scratch = [pltpu.VMEM((tile_r, dh_p), jnp.float32)]
        dims = ("parallel", "arbitrary")

    return pl.pallas_call(
        kernel,
        out_shape=jax.ShapeDtypeStruct((r_p, dh_p), out_dtype),
        grid=grid,
        in_specs=in_specs,
        out_specs=out_specs,
        scratch_shapes=scratch,
        compiler_params=pltpu.CompilerParams(
            dimension_semantics=dims,
            vmem_limit_bytes=vmem_limit,
        ),
    )(x_pad, params["w6_p"], params["b6_p"], params["w7_p"], params["b7_p"])


# ----------------------------------------------------------------------------
# ROIAlign as separable interpolation matmuls (MXU-friendly, no gathers)
# ----------------------------------------------------------------------------
def _roi_interp_matrix(lo, extent, nbins, sr, grid_size):
    """Per-axis matrix folding bilinear interpolation + in-bin averaging."""
    bin_sz = extent / nbins
    s = jnp.arange(nbins * sr, dtype=jnp.float32)
    coords = lo + (s + 0.5) * bin_sz / sr
    coords = jnp.clip(coords, 0.0, grid_size - 1.0)
    grid = jnp.arange(grid_size, dtype=jnp.float32)
    hat = jnp.maximum(1.0 - jnp.abs(coords[:, None] - grid[None, :]), 0.0)
    return hat.reshape(nbins, sr, grid_size).mean(axis=1)


def roi_align_flat(feat, rois, output_size, spatial_scale, sampling_ratio, *,
                   out_dtype=jnp.float32, pad_to=None, r_chunk=256):
    """ROIAlign via separable matmuls; emits flattened (R, C*Ph*Pw) directly,
    optionally already zero-padded/cast for the downstream Pallas MLP.

    feat: (C, H, W) f32; rois: (R, 4) [x1, y1, x2, y2] in image coordinates.
    Flatten order matches torch's .view(R, -1) on an (R, C, Ph, Pw) tensor.
    """
    # TODO(synk): torchvision ROIAlign zeroes samples with coords < -1 or > H/W
    # before clamping, supports aligned=True (-0.5 px), adaptive sampling_ratio
    # <= 0 and the 5-column (batch_idx, box) ROI format; this keeps the
    # clamp-only, aligned=False, fixed-sampling, single-image behaviour.
    # TODO(synk): at production feature-map sizes, fuse this stage into a
    # Pallas kernel (scalar-prefetched per-ROI offsets, banded interp weights).
    C, H, W = feat.shape
    ph, pw = output_size
    sr = sampling_ratio
    R = rois.shape[0]

    def one_roi_mats(box):
        x1, y1, x2, y2 = box * spatial_scale
        roi_w = jnp.maximum(x2 - x1, 1.0)
        roi_h = jnp.maximum(y2 - y1, 1.0)
        py = _roi_interp_matrix(y1, roi_h, ph, sr, H)          # (ph, H)
        px = _roi_interp_matrix(x1, roi_w, pw, sr, W)          # (pw, W)
        return py, px

    def pool_chunk(boxes):
        py, px = jax.vmap(one_roi_mats)(boxes)                 # (r,ph,H),(r,pw,W)
        # pooled[r,c,p,q] = sum_{h,w} py[r,p,h] * feat[c,h,w] * px[r,q,w]
        tmp = jnp.einsum("rph,chw->rcpw", py, feat)
        pooled = jnp.einsum("rcpw,rqw->rcpq", tmp, px)
        return pooled.reshape(boxes.shape[0], C * ph * pw).astype(out_dtype)

    # Chunk ROIs to bound the (r, C, ph, W) intermediate at production sizes.
    if R <= r_chunk:
        flat = pool_chunk(rois)
    else:
        flat = jnp.concatenate(
            [pool_chunk(rois[i:i + r_chunk]) for i in range(0, R, r_chunk)],
            axis=0)

    if pad_to is not None:
        r_p, din_p = pad_to
        flat = jnp.pad(flat, ((0, r_p - R), (0, din_p - C * ph * pw)))
    return flat


def _roi_align_gather_ref(feat, rois, output_size, spatial_scale,
                          sampling_ratio):
    """Reference-only ROIAlign via per-sample bilinear gathers (slow on TPU)."""
    C, H, W = feat.shape
    ph, pw = output_size
    sr = sampling_ratio

    def bilinear(ys, xs):
        y = jnp.clip(ys, 0.0, H - 1.0)
        x = jnp.clip(xs, 0.0, W - 1.0)
        y0 = jnp.floor(y).astype(jnp.int32)
        x0 = jnp.floor(x).astype(jnp.int32)
        y1 = jnp.minimum(y0 + 1, H - 1)
        x1 = jnp.minimum(x0 + 1, W - 1)
        ly = y - y0.astype(jnp.float32)
        lx = x - x0.astype(jnp.float32)
        hy, hx = 1.0 - ly, 1.0 - lx
        return (feat[:, y0, x0] * (hy * hx) + feat[:, y0, x1] * (hy * lx)
                + feat[:, y1, x0] * (ly * hx) + feat[:, y1, x1] * (ly * lx))

    def one_roi(box):
        x1, y1, x2, y2 = box * spatial_scale
        roi_w = jnp.maximum(x2 - x1, 1.0)
        roi_h = jnp.maximum(y2 - y1, 1.0)
        iy = jnp.arange(ph * sr, dtype=jnp.float32)
        ix = jnp.arange(pw * sr, dtype=jnp.float32)
        ys = y1 + (iy + 0.5) * (roi_h / ph) / sr
        xs = x1 + (ix + 0.5) * (roi_w / pw) / sr
        yy, xx = jnp.meshgrid(ys, xs, indexing="ij")
        vals = bilinear(yy.reshape(-1), xx.reshape(-1))
        return vals.reshape(C, ph, sr, pw, sr).mean(axis=(2, 4))

    return jax.vmap(one_roi)(rois)


# ----------------------------------------------------------------------------
# Full head
# ----------------------------------------------------------------------------
def roi_cls_head_forward(feat, rois, params, output_size, spatial_scale,
                         sampling_ratio, *, tile_r=None):
    R = rois.shape[0]
    tile_r = _pick_tile_r(R) if tile_r is None else tile_r
    r_p = _round_up(max(R, tile_r), tile_r)
    # Pooled activations are emitted in bf16, already padded to the kernel's
    # (r_p, din_p) layout -> no extra f32 HBM round trip between the stages.
    x_pad = roi_align_flat(feat, rois, output_size, spatial_scale,
                           sampling_ratio, out_dtype=jnp.bfloat16,
                           pad_to=(r_p, params["din_p"]))
    out_p = mlp_head_pallas(x_pad, params, tile_r=tile_r)
    return out_p[:R, :params["dh"]]


if __name__ == "__main__":
    # Small, deterministic config.
    C, H, W = 4, 16, 16          # dim_in = 4, feature map 16x16
    Ph, Pw = 4, 4                # ROI_XFORM_RESOLUTION_CLS
    sampling_ratio = 2           # ROI_XFORM_SAMPLING_RATIO
    spatial_scale = 0.25         # feature stride 4
    mlp_dim = 128                # GRID_RCNN.MLP_HEAD.MLP_DIM (small)
    R = 8                        # number of proposals
    input_size = C * Ph * Pw     # 64

    key = jax.random.PRNGKey(0)
    k_feat, k_ctr, k_sz, k_w6, k_b6, k_w7, k_b7 = jax.random.split(key, 7)

    feat = jax.random.normal(k_feat, (C, H, W), dtype=jnp.float32)

    # Deterministic proposal boxes [x1, y1, x2, y2] in image coordinates.
    centers = jax.random.uniform(k_ctr, (R, 2), minval=8.0, maxval=56.0)
    sizes = jax.random.uniform(k_sz, (R, 2), minval=8.0, maxval=24.0)
    rois = jnp.concatenate([centers - sizes / 2, centers + sizes / 2], axis=1)

    # fc weights: PyTorch Linear stores W as (out, in).
    w6 = jax.random.normal(k_w6, (mlp_dim, input_size), jnp.float32) * 0.05
    b6 = jax.random.normal(k_b6, (mlp_dim,), jnp.float32) * 0.01
    w7 = jax.random.normal(k_w7, (mlp_dim, mlp_dim), jnp.float32) * 0.05
    b7 = jax.random.normal(k_b7, (mlp_dim,), jnp.float32) * 0.01
    # TODO(synk): cfg.GRID_RCNN.MLP_HEAD.USE_BN/USE_GN/USE_WS default to off;
    # not modeled.

    # One-time model-init step: pad + cast the weights once, off the hot path.
    params = prepare_mlp_params(w6, b6, w7, b7)

    out = roi_cls_head_forward(feat, rois, params, (Ph, Pw), spatial_scale,
                               sampling_ratio)
    out = jax.block_until_ready(out)
    assert out.shape == (R, mlp_dim)

    # --- cross-checks --------------------------------------------------------
    # 1) Separable-matmul ROIAlign vs. direct bilinear-gather formulation.
    pooled_ref = _roi_align_gather_ref(feat, rois, (Ph, Pw), spatial_scale,
                                       sampling_ratio).reshape(R, -1)
    pooled_new = roi_align_flat(feat, rois, (Ph, Pw), spatial_scale,
                                sampling_ratio)
    assert jnp.allclose(pooled_new, pooled_ref, atol=1e-4, rtol=1e-4)

    # 2) Fused Pallas MLP (auto plan -> resident variant here) vs. f32 ref.
    ref = jnp.maximum(
        jnp.maximum(pooled_ref @ w6.T + b6, 0.0) @ w7.T + b7, 0.0)
    assert jnp.allclose(out, ref, atol=2e-2, rtol=2e-2)

    # 3) Also exercise the K-tiled accumulator variant (used when w6 cannot
    #    stay VMEM-resident, e.g. huge Din on v7x) against the same reference.
    tile_r = _pick_tile_r(R)
    r_p = _round_up(max(R, tile_r), tile_r)
    x_pad = roi_align_flat(feat, rois, (Ph, Pw), spatial_scale, sampling_ratio,
                           out_dtype=jnp.bfloat16,
                           pad_to=(r_p, params["din_p"]))
    out_kt = mlp_head_pallas(x_pad, params, tile_r=tile_r,
                             variant="ktiled", tile_k=128)
    out_kt = jax.block_until_ready(out_kt)[:R, :mlp_dim]
    assert jnp.allclose(out_kt, ref, atol=2e-2, rtol=2e-2)

    print("KERNEL_OK")
</pallas_src>

<mosaic_0001>
module attributes {stable_mosaic.version = 11 : i64} {
  func.func @_mlp_kernel_resident(%arg0: i32, %arg1: memref<8x256xbf16, #tpu.memory_space<vmem>>, %arg2: memref<256x256xbf16, #tpu.memory_space<vmem>>, %arg3: memref<1x256xf32, #tpu.memory_space<vmem>>, %arg4: memref<256x256xbf16, #tpu.memory_space<vmem>>, %arg5: memref<1x256xf32, #tpu.memory_space<vmem>>, %arg6: memref<8x256xf32, #tpu.memory_space<vmem>>) attributes {dimension_semantics = [#tpu.dimension_semantics<parallel>], iteration_bounds = array<i64: 1>, scalar_prefetch = 0 : i64, scratch_operands = 0 : i64, tpu.core_type = #tpu.core_type<tc>, window_params = [{transform_indices = @transform_0, window_bounds = array<i64: 8, 256>}, {pipeline_mode = #tpu.pipeline_mode<synchronous>, transform_indices = @transform_1, window_bounds = array<i64: 256, 256>}, {pipeline_mode = #tpu.pipeline_mode<synchronous>, transform_indices = @transform_2, window_bounds = array<i64: 1, 256>}, {pipeline_mode = #tpu.pipeline_mode<synchronous>, transform_indices = @transform_3, window_bounds = array<i64: 256, 256>}, {pipeline_mode = #tpu.pipeline_mode<synchronous>, transform_indices = @transform_4, window_bounds = array<i64: 1, 256>}, {transform_indices = @transform_5, window_bounds = array<i64: 8, 256>}]} {
    %c0 = arith.constant 0 : index
    %c0_0 = arith.constant 0 : index
    %0 = vector.load %arg1[%c0, %c0_0] : memref<8x256xbf16, #tpu.memory_space<vmem>>, vector<8x256xbf16>
    %c0_1 = arith.constant 0 : index
    %c0_2 = arith.constant 0 : index
    %1 = vector.load %arg2[%c0_1, %c0_2] : memref<256x256xbf16, #tpu.memory_space<vmem>>, vector<256x256xbf16>
    %cst = arith.constant dense<0.000000e+00> : vector<8x256xf32>
    %2 = tpu.matmul %0, %1, %cst {dimension_numbers = #tpu.dot_dimension_numbers<[1], [0], [0], [1], [0, 0, 1, 1], [], []>} : vector<8x256xbf16>, vector<256x256xbf16>, vector<8x256xf32> -> vector<8x256xf32>
    %c0_3 = arith.constant 0 : index
    %c0_4 = arith.constant 0 : index
    %3 = vector.load %arg3[%c0_3, %c0_4] : memref<1x256xf32, #tpu.memory_space<vmem>>, vector<1x256xf32>
    %4 = vector.broadcast %3 : vector<1x256xf32> to vector<8x256xf32>
    %5 = arith.addf %2, %4 : vector<8x256xf32>
    %cst_5 = arith.constant 0.000000e+00 : f32
    %6 = vector.broadcast %cst_5 : f32 to vector<8x256xf32>
    %7 = arith.maximumf %5, %6 : vector<8x256xf32>
    %8 = arith.truncf %7 : vector<8x256xf32> to vector<8x256xbf16>
    %c0_6 = arith.constant 0 : index
    %c0_7 = arith.constant 0 : index
    %9 = vector.load %arg4[%c0_6, %c0_7] : memref<256x256xbf16, #tpu.memory_space<vmem>>, vector<256x256xbf16>
    %cst_8 = arith.constant dense<0.000000e+00> : vector<8x256xf32>
    %10 = tpu.matmul %8, %9, %cst_8 {dimension_numbers = #tpu.dot_dimension_numbers<[1], [0], [0], [1], [0, 0, 1, 1], [], []>} : vector<8x256xbf16>, vector<256x256xbf16>, vector<8x256xf32> -> vector<8x256xf32>
    %c0_9 = arith.constant 0 : index
    %c0_10 = arith.constant 0 : index
    %11 = vector.load %arg5[%c0_9, %c0_10] : memref<1x256xf32, #tpu.memory_space<vmem>>, vector<1x256xf32>
    %12 = vector.broadcast %11 : vector<1x256xf32> to vector<8x256xf32>
    %13 = arith.addf %10, %12 : vector<8x256xf32>
    %cst_11 = arith.constant 0.000000e+00 : f32
    %14 = vector.broadcast %cst_11 : f32 to vector<8x256xf32>
    %15 = arith.maximumf %13, %14 : vector<8x256xf32>
    %c0_12 = arith.constant 0 : index
    %c0_13 = arith.constant 0 : index
    %16 = vector.load %arg6[%c0_12, %c0_13] : memref<8x256xf32, #tpu.memory_space<vmem>>, vector<8x256xf32>
    tpu.vector_store %arg6[%c0_12, %c0_13], %15 {strides = array<i32>} : memref<8x256xf32, #tpu.memory_space<vmem>>, vector<8x256xf32>,
    return
  }
  func.func @transform_0(%arg0: i32) -> (i32, i32) {
    %c0_i32 = arith.constant 0 : i32
    %c0_i32_0 = arith.constant 0 : i32
    return %arg0, %c0_i32 : i32, i32
  }
  func.func @transform_1(%arg0: i32) -> (i32, i32) {
    %c0_i32 = arith.constant 0 : i32
    %c0_i32_0 = arith.constant 0 : i32
    %c0_i32_1 = arith.constant 0 : i32
    return %c0_i32, %c0_i32_0 : i32, i32
  }
  func.func @transform_2(%arg0: i32) -> (i32, i32) {
    %c0_i32 = arith.constant 0 : i32
    %c0_i32_0 = arith.constant 0 : i32
    %c0_i32_1 = arith.constant 0 : i32
    return %c0_i32, %c0_i32_0 : i32, i32
  }
  func.func @transform_3(%arg0: i32) -> (i32, i32) {
    %c0_i32 = arith.constant 0 : i32
    %c0_i32_0 = arith.constant 0 : i32
    %c0_i32_1 = arith.constant 0 : i32
    return %c0_i32, %c0_i32_0 : i32, i32
  }
  func.func @transform_4(%arg0: i32) -> (i32, i32) {
    %c0_i32 = arith.constant 0 : i32
    %c0_i32_0 = arith.constant 0 : i32
    %c0_i32_1 = arith.constant 0 : i32
    return %c0_i32, %c0_i32_0 : i32, i32
  }
  func.func @transform_5(%arg0: i32) -> (i32, i32) {
    %c0_i32 = arith.constant 0 : i32
    %c0_i32_0 = arith.constant 0 : i32
    return %arg0, %c0_i32 : i32, i32
  }
}

</mosaic_0001>

<llo_original>
// kernel: tpu_custom_call.1
$region0: #{tpu_custom_call.1}
  #allocation0 [shape = 'u32[]', space=smem, size = 0x4, offset = 0x4, fixed_abs, tag = 'smem constant byte address 0x4 - core index']
  #allocation1 [shape = 'u32[144,128]{1,0:T(1,128)}', space=vmem, size = 0x12000, scoped, tag = 'internal scratch']
  %s0 = inlined_call_operand.hbm [shape: bf16[8,256], index: 0, kind: input, shape index: {}]
  %s1 = inlined_call_operand.hbm [shape: bf16[256,256], index: 1, kind: input, shape index: {}]
  %s2 = inlined_call_operand.vmem [shape: f32[1,256], index: 2, kind: input, shape index: {}]
  %s3 = inlined_call_operand.hbm [shape: bf16[256,256], index: 3, kind: input, shape index: {}]
  %s4 = inlined_call_operand.vmem [shape: f32[1,256], index: 4, kind: input, shape index: {}]
  %s5 = inlined_call_operand.hbm [shape: f32[8,256], index: 5, kind: output, shape index: {}]
  %s6 = sld [smem:[#allocation0]]
  $region42: #{tpu_custom_call.1} parent=0
    _
  %s8 = ssub.s32 1, %s6
  %s9 = scalar_select 0, %s8, %s6
  $region1: #{tpu_custom_call.1} parent=0
    #allocation2 [shape = 'u8[4096]{0}', space=vmem, size = 0x1000, scoped, tag = 'input window, operand 0, single buffered']
    #allocation3 [shape = 's32[1]{0}', space=sflag, size = 0x4, scoped, tag = 'scoped memory for tpu_custom_call.1']
    #allocation4 [shape = 's32[1]{0}', space=sflag, size = 0x4, scoped, tag = 'scoped memory for tpu_custom_call.1']
    #allocation5 [shape = 'u8[131072]{0}', space=vmem, size = 0x20000, scoped, tag = 'input window, operand 1, single buffered']
    #allocation6 [shape = 's32[1]{0}', space=sflag, size = 0x4, scoped, tag = 'scoped memory for tpu_custom_call.1']
    #allocation7 [shape = 'u8[131072]{0}', space=vmem, size = 0x20000, scoped, tag = 'input window, operand 3, single buffered']
    #allocation8 [shape = 'u8[8192]{0}', space=vmem, size = 0x2000, scoped, tag = 'output window, operand 0, single buffered']
    %10 = vsyncpa [#allocation3], 0
    %11 = vsyncpa [#allocation6], 0
    %12 = vsyncpa [#allocation4], 0
    // Predicated region
    $region2: #{tpu_custom_call.1} parent=1 // pred_check
      _
    $region3: #{tpu_custom_call.1} parent=1 // pred_check_branch
      %14 = sbr.rel (0) target = $region5
    $region4: #{tpu_custom_call.1} parent=1 // pred_region
      %s16 = ssub.s32 128, 128
      %17 = vsyncadd [#allocation3], %s16
      %s19 = sshll.u32 [#allocation2], 4
      %s20 = int_to_ptr.vmem [resolvable:$true] %s19
      %22 = dma.hbm_to_vmem [thread:$0]  %s0, 128, %s20, [#allocation3]
    $region5: #{tpu_custom_call.1} parent=1 // pred_fallthru
      _
    // Predicated region
    $region6: #{tpu_custom_call.1} parent=1 // pred_check
      _
    $region7: #{tpu_custom_call.1} parent=1 // pred_check_branch
      %24 = sbr.rel (0) target = $region9
    $region8: #{tpu_custom_call.1} parent=1 // pred_region
      %s26 = ssub.s32 4096, 4096
      %27 = vsyncadd [#allocation6], %s26
      %s28 = sshll.u32 [#allocation5], 4
      %s29 = int_to_ptr.vmem [resolvable:$true] %s28
      %34 = dma.hbm_to_vmem [thread:$0]  %s1, 4096, %s29, [#allocation6], 128, 128, 8
    $region9: #{tpu_custom_call.1} parent=1 // pred_fallthru
      _
    // Predicated region
    $region10: #{tpu_custom_call.1} parent=1 // pred_check
      _
    $region11: #{tpu_custom_call.1} parent=1 // pred_check_branch
      %36 = sbr.rel (0) target = $region13
    $region12: #{tpu_custom_call.1} parent=1 // pred_region
      _
    $region13: #{tpu_custom_call.1} parent=1 // pred_fallthru
      _
    // Predicated region
    $region14: #{tpu_custom_call.1} parent=1 // pred_check
      _
    $region15: #{tpu_custom_call.1} parent=1 // pred_check_branch
      %38 = sbr.rel (0) target = $region17
    $region16: #{tpu_custom_call.1} parent=1 // pred_region
      %s40 = ssub.s32 4096, 4096
      %41 = vsyncadd [#allocation6], %s40
      %s42 = sshll.u32 [#allocation7], 4
      %s43 = int_to_ptr.vmem [resolvable:$true] %s42
      %48 = dma.hbm_to_vmem [thread:$0]  %s3, 4096, %s43, [#allocation6], 128, 128, 8
    $region17: #{tpu_custom_call.1} parent=1 // pred_fallthru
      _
    // Predicated region
    $region18: #{tpu_custom_call.1} parent=1 // pred_check
      _
    $region19: #{tpu_custom_call.1} parent=1 // pred_check_branch
      %50 = sbr.rel (0) target = $region21
    $region20: #{tpu_custom_call.1} parent=1 // pred_region
      _
    $region21: #{tpu_custom_call.1} parent=1 // pred_fallthru
      _
    // Predicated region
    $region22: #{tpu_custom_call.1} parent=1 // pred_check
      _
    $region23: #{tpu_custom_call.1} parent=1 // pred_check_branch
      %52 = sbr.rel (0) target = $region25
    $region24: #{tpu_custom_call.1} parent=1 // pred_region
      %53 = dma.done [#allocation3], 128
    $region25: #{tpu_custom_call.1} parent=1 // pred_fallthru
      _
    // Predicated region
    $region26: #{tpu_custom_call.1} parent=1 // pred_check
      _
    $region27: #{tpu_custom_call.1} parent=1 // pred_check_branch
      %55 = sbr.rel (0) target = $region29
    $region28: #{tpu_custom_call.1} parent=1 // pred_region
      %56 = dma.done [#allocation6], 4096
    $region29: #{tpu_custom_call.1} parent=1 // pred_fallthru
      _
    // Predicated region
    $region30: #{tpu_custom_call.1} parent=1 // pred_check
      _
    $region31: #{tpu_custom_call.1} parent=1 // pred_check_branch
      %58 = sbr.rel (0) target = $region33
    $region32: #{tpu_custom_call.1} parent=1 // pred_region
      %59 = dma.done [#allocation6], 4096
    $region33: #{tpu_custom_call.1} parent=1 // pred_fallthru
      _
    %v60 = vld [vmem:[#allocation2] sm:$0xff]
    %v61 = vld [vmem:[#allocation5] sm:$0xff]
    %v62 = vld [vmem:[#allocation5 + $0x8] sm:$0xff]
    %v63 = vld [vmem:[#allocation5 + $0x10] sm:$0xff]
    %v64 = vld [vmem:[#allocation5 + $0x18] sm:$0xff]
    %v65 = vld [vmem:[#allocation5 + $0x20] sm:$0xff]
    %v66 = vld [vmem:[#allocation5 + $0x28] sm:$0xff]
    %v67 = vld [vmem:[#allocation5 + $0x30] sm:$0xff]
    %v68 = vld [vmem:[#allocation5 + $0x38] sm:$0xff]
    %v69 = vld [vmem:[#allocation5 + $0x40] sm:$0xff]
    %v70 = vld [vmem:[#allocation5 + $0x48] sm:$0xff]
    %v71 = vld [vmem:[#allocation5 + $0x50] sm:$0xff]
    %v72 = vld [vmem:[#allocation5 + $0x58] sm:$0xff]
    %v73 = vld [vmem:[#allocation5 + $0x60] sm:$0xff]
    %v74 = vld [vmem:[#allocation5 + $0x68] sm:$0xff]
    %v75 = vld [vmem:[#allocation5 + $0x70] sm:$0xff]
    %v76 = vld [vmem:[#allocation5 + $0x78] sm:$0xff]
    %v77 = vld [vmem:[#allocation5 + $0x80] sm:$0xff]
    %v78 = vld [vmem:[#allocation5 + $0x88] sm:$0xff]
    %v79 = vld [vmem:[#allocation5 + $0x90] sm:$0xff]
    %v80 = vld [vmem:[#allocation5 + $0x98] sm:$0xff]
    %v81 = vld [vmem:[#allocation5 + $0xa0] sm:$0xff]
    %v82 = vld [vmem:[#allocation5 + $0xa8] sm:$0xff]
    %v83 = vld [vmem:[#allocation5 + $0xb0] sm:$0xff]
    %v84 = vld [vmem:[#allocation5 + $0xb8] sm:$0xff]
    %v85 = vld [vmem:[#allocation5 + $0xc0] sm:$0xff]
    %v86 = vld [vmem:[#allocation5 + $0xc8] sm:$0xff]
    %v87 = vld [vmem:[#allocation5 + $0xd0] sm:$0xff]
    %v88 = vld [vmem:[#allocation5 + $0xd8] sm:$0xff]
    %v89 = vld [vmem:[#allocation5 + $0xe0] sm:$0xff]
    %v90 = vld [vmem:[#allocation5 + $0xe8] sm:$0xff]
    %v91 = vld [vmem:[#allocation5 + $0xf0] sm:$0xff]
    %v92 = vld [vmem:[#allocation5 + $0xf8] sm:$0xff]
    %v93 = vld [vmem:[%s2] sm:$0x3]
    %v95 = vlaneseq
    %v96 = vshrl.u32 %v95, 7
    %v97 = vsub.s32 0, %v96
    %v98 = vrot.slane %v93, %v97
    %v99 = vlaneseq
    %v100 = vshrl.u32 %v99, 7
    %v101 = vsub.s32 1, %v100
    %v102 = vrot.slane %v93, %v101
    %v106 = vunpack.c.l.b16 %v60
    %v107 = vunpack.c.h.b16 %v60
    %v108 = vpack.c.b16 %v106, %v106
    %v109 = vpack.c.b16 %v107, %v107
    %v144 = vunpack.c.l.b16 %v61
    %v145 = vunpack.c.h.b16 %v61
    %v146 = vunpack.c.l.b16 %v62
    %v147 = vunpack.c.h.b16 %v62
    %v148 = vunpack.c.l.b16 %v63
    %v149 = vunpack.c.h.b16 %v63
    %v150 = vunpack.c.l.b16 %v64
    %v151 = vunpack.c.h.b16 %v64
    %v152 = vunpack.c.l.b16 %v65
    %v153 = vunpack.c.h.b16 %v65
    %v154 = vunpack.c.l.b16 %v66
    %v155 = vunpack.c.h.b16 %v66
    %v156 = vunpack.c.l.b16 %v67
    %v157 = vunpack.c.h.b16 %v67
    %v158 = vunpack.c.l.b16 %v68
    %v159 = vunpack.c.h.b16 %v68
    %v160 = vunpack.c.l.b16 %v69
    %v161 = vunpack.c.h.b16 %v69
    %v162 = vunpack.c.l.b16 %v70
    %v163 = vunpack.c.h.b16 %v70
    %v164 = vunpack.c.l.b16 %v71
    %v165 = vunpack.c.h.b16 %v71
    %v166 = vunpack.c.l.b16 %v72
    %v167 = vunpack.c.h.b16 %v72
    %v168 = vunpack.c.l.b16 %v73
    %v169 = vunpack.c.h.b16 %v73
    %v170 = vunpack.c.l.b16 %v74
    %v171 = vunpack.c.h.b16 %v74
    %v172 = vunpack.c.l.b16 %v75
    %v173 = vunpack.c.h.b16 %v75
    %v174 = vunpack.c.l.b16 %v76
    %v175 = vunpack.c.h.b16 %v76
    %v176 = vunpack.c.l.b16 %v77
    %v177 = vunpack.c.h.b16 %v77
    %v178 = vunpack.c.l.b16 %v78
    %v179 = vunpack.c.h.b16 %v78
    %v180 = vunpack.c.l.b16 %v79
    %v181 = vunpack.c.h.b16 %v79
    %v182 = vunpack.c.l.b16 %v80
    %v183 = vunpack.c.h.b16 %v80
    %v184 = vunpack.c.l.b16 %v81
    %v185 = vunpack.c.h.b16 %v81
    %v186 = vunpack.c.l.b16 %v82
    %v187 = vunpack.c.h.b16 %v82
    %v188 = vunpack.c.l.b16 %v83
    %v189 = vunpack.c.h.b16 %v83
    %v190 = vunpack.c.l.b16 %v84
    %v191 = vunpack.c.h.b16 %v84
    %v192 = vunpack.c.l.b16 %v85
    %v193 = vunpack.c.h.b16 %v85
    %v194 = vunpack.c.l.b16 %v86
    %v195 = vunpack.c.h.b16 %v86
    %v196 = vunpack.c.l.b16 %v87
    %v197 = vunpack.c.h.b16 %v87
    %v198 = vunpack.c.l.b16 %v88
    %v199 = vunpack.c.h.b16 %v88
    %v200 = vunpack.c.l.b16 %v89
    %v201 = vunpack.c.h.b16 %v89
    %v202 = vunpack.c.l.b16 %v90
    %v203 = vunpack.c.h.b16 %v90
    %v204 = vunpack.c.l.b16 %v91
    %v205 = vunpack.c.h.b16 %v91
    %v206 = vunpack.c.l.b16 %v92
    %v207 = vunpack.c.h.b16 %v92
    %v208 = vpack.c.b16 %v146, %v144
    %v209 = vpack.c.b16 %v147, %v145
    %v210 = vpack.c.b16 %v150, %v148
    %v211 = vpack.c.b16 %v151, %v149
    %v212 = vpack.c.b16 %v154, %v152
    %v213 = vpack.c.b16 %v155, %v153
    %v214 = vpack.c.b16 %v158, %v156
    %v215 = vpack.c.b16 %v159, %v157
    %v216 = vpack.c.b16 %v162, %v160
    %v217 = vpack.c.b16 %v163, %v161
    %v218 = vpack.c.b16 %v166, %v164
    %v219 = vpack.c.b16 %v167, %v165
    %v220 = vpack.c.b16 %v170, %v168
    %v221 = vpack.c.b16 %v171, %v169
    %v222 = vpack.c.b16 %v174, %v172
    %v223 = vpack.c.b16 %v175, %v173
    %v224 = vpack.c.b16 %v178, %v176
    %v225 = vpack.c.b16 %v179, %v177
    %v226 = vpack.c.b16 %v182, %v180
    %v227 = vpack.c.b16 %v183, %v181
    %v228 = vpack.c.b16 %v186, %v184
    %v229 = vpack.c.b16 %v187, %v185
    %v230 = vpack.c.b16 %v190, %v188
    %v231 = vpack.c.b16 %v191, %v189
    %v232 = vpack.c.b16 %v194, %v192
    %v233 = vpack.c.b16 %v195, %v193
    %v234 = vpack.c.b16 %v198, %v196
    %v235 = vpack.c.b16 %v199, %v197
    %v236 = vpack.c.b16 %v202, %v200
    %v237 = vpack.c.b16 %v203, %v201
    %v238 = vpack.c.b16 %v206, %v204
    %v239 = vpack.c.b16 %v207, %v205
    %272 = vmatprep.subr.bf16.mxu0 %v223
    %273 = vmatpush1.bf16.msra.mxu0 %v222
    %274 = vmatprep.subr.bf16.mxu0 %v221
    %275 = vmatpush1.bf16.msra.mxu0 %v220
    %276 = vmatprep.subr.bf16.mxu0 %v219
    %277 = vmatpush1.bf16.msra.mxu0 %v218
    %278 = vmatprep.subr.bf16.mxu0 %v217
    %279 = vmatpush1.bf16.msra.mxu0 %v216
    %280 = vmatprep.subr.bf16.mxu0 %v215
    %281 = vmatpush1.bf16.msra.mxu0 %v214
    %282 = vmatprep.subr.bf16.mxu0 %v213
    %283 = vmatpush1.bf16.msra.mxu0 %v212
    %284 = vmatprep.subr.bf16.mxu0 %v211
    %285 = vmatpush1.bf16.msra.mxu0 %v210
    %286 = vmatprep.subr.bf16.mxu0 %v209
    %287 = vmatpush1.bf16.msra.mxu0 %v208
    %288 = vmatprep.subr.bf16.mxu0 %v239
    %289 = vmatpush2.bf16.msra.mxu0 %v238
    %290 = vmatprep.subr.bf16.mxu0 %v237
    %291 = vmatpush2.bf16.msra.mxu0 %v236
    %292 = vmatprep.subr.bf16.mxu0 %v235
    %293 = vmatpush2.bf16.msra.mxu0 %v234
    %294 = vmatprep.subr.bf16.mxu0 %v233
    %295 = vmatpush2.bf16.msra.mxu0 %v232
    %296 = vmatprep.subr.bf16.mxu0 %v231
    %297 = vmatpush2.bf16.msra.mxu0 %v230
    %298 = vmatprep.subr.bf16.mxu0 %v229
    %299 = vmatpush2.bf16.msra.mxu0 %v228
    %300 = vmatprep.subr.bf16.mxu0 %v227
    %301 = vmatpush2.bf16.msra.mxu0 %v226
    %302 = vmatprep.subr.bf16.mxu0 %v225
    %303 = vmatpush2.bf16.msra.mxu0 %v224
    %304 = vmatprep.mubr.bf16.mxu0 %v109
    %305 = vmatmul.mubr.bf16.gmra.mxu0 %v108
    %v306 = vpop.f32.mrf.mxu0
    %v307 = vadd.f32 %v98, %v306
    %v308 = vpop.f32.mrf.mxu0
    %v309 = vadd.f32 %v102, %v308
    %v310 = vpop.f32.mrf.mxu0
    %v311 = vpop.f32.mrf.mxu0
    %312 = vdwg.mxu0
    %v313 = vmax.f32 %v307, 0.0
    %v314 = vmax.f32 %v309, 0.0
    %v315 = vpack.c.bf16 %v313, %v313
    %v316 = vpack.c.bf16 %v314, %v314
    %v317 = vld [vmem:[#allocation7] sm:$0xff]
    %v318 = vld [vmem:[#allocation7 + $0x8] sm:$0xff]
    %v319 = vld [vmem:[#allocation7 + $0x10] sm:$0xff]
    %v320 = vld [vmem:[#allocation7 + $0x18] sm:$0xff]
    %v321 = vld [vmem:[#allocation7 + $0x20] sm:$0xff]
    %v322 = vld [vmem:[#allocation7 + $0x28] sm:$0xff]
    %v323 = vld [vmem:[#allocation7 + $0x30] sm:$0xff]
    %v324 = vld [vmem:[#allocation7 + $0x38] sm:$0xff]
    %v325 = vld [vmem:[#allocation7 + $0x40] sm:$0xff]
    %v326 = vld [vmem:[#allocation7 + $0x48] sm:$0xff]
    %v327 = vld [vmem:[#allocation7 + $0x50] sm:$0xff]
    %v328 = vld [vmem:[#allocation7 + $0x58] sm:$0xff]
    %v329 = vld [vmem:[#allocation7 + $0x60] sm:$0xff]
    %v330 = vld [vmem:[#allocation7 + $0x68] sm:$0xff]
    %v331 = vld [vmem:[#allocation7 + $0x70] sm:$0xff]
    %v332 = vld [vmem:[#allocation7 + $0x78] sm:$0xff]
    %v333 = vld [vmem:[#allocation7 + $0x80] sm:$0xff]
    %v334 = vld [vmem:[#allocation7 + $0x88] sm:$0xff]
    %v335 = vld [vmem:[#allocation7 + $0x90] sm:$0xff]
    %v336 = vld [vmem:[#allocation7 + $0x98] sm:$0xff]
    %v337 = vld [vmem:[#allocation7 + $0xa0] sm:$0xff]
    %v338 = vld [vmem:[#allocation7 + $0xa8] sm:$0xff]
    %v339 = vld [vmem:[#allocation7 + $0xb0] sm:$0xff]
    %v340 = vld [vmem:[#allocation7 + $0xb8] sm:$0xff]
    %v341 = vld [vmem:[#allocation7 + $0xc0] sm:$0xff]
    %v342 = vld [vmem:[#allocation7 + $0xc8] sm:$0xff]
    %v343 = vld [vmem:[#allocation7 + $0xd0] sm:$0xff]
    %v344 = vld [vmem:[#allocation7 + $0xd8] sm:$0xff]
    %v345 = vld [vmem:[#allocation7 + $0xe0] sm:$0xff]
    %v346 = vld [vmem:[#allocation7 + $0xe8] sm:$0xff]
    %v347 = vld [vmem:[#allocation7 + $0xf0] sm:$0xff]
    %v348 = vld [vmem:[#allocation7 + $0xf8] sm:$0xff]
    %v349 = vld [vmem:[%s4] sm:$0x3]
    %v351 = vlaneseq
    %v352 = vshrl.u32 %v351, 7
    %v353 = vsub.s32 0, %v352
    %v354 = vrot.slane %v349, %v353
    %v355 = vlaneseq
    %v356 = vshrl.u32 %v355, 7
    %v357 = vsub.s32 1, %v356
    %v358 = vrot.slane %v349, %v357
    %v393 = vunpack.c.l.b16 %v317
    %v394 = vunpack.c.h.b16 %v317
    %v395 = vunpack.c.l.b16 %v318
    %v396 = vunpack.c.h.b16 %v318
    %v397 = vunpack.c.l.b16 %v319
    %v398 = vunpack.c.h.b16 %v319
    %v399 = vunpack.c.l.b16 %v320
    %v400 = vunpack.c.h.b16 %v320
    %v401 = vunpack.c.l.b16 %v321
    %v402 = vunpack.c.h.b16 %v321
    %v403 = vunpack.c.l.b16 %v322
    %v404 = vunpack.c.h.b16 %v322
    %v405 = vunpack.c.l.b16 %v323
    %v406 = vunpack.c.h.b16 %v323
    %v407 = vunpack.c.l.b16 %v324
    %v408 = vunpack.c.h.b16 %v324
    %v409 = vunpack.c.l.b16 %v325
    %v410 = vunpack.c.h.b16 %v325
    %v411 = vunpack.c.l.b16 %v326
    %v412 = vunpack.c.h.b16 %v326
    %v413 = vunpack.c.l.b16 %v327
    %v414 = vunpack.c.h.b16 %v327
    %v415 = vunpack.c.l.b16 %v328
    %v416 = vunpack.c.h.b16 %v328
    %v417 = vunpack.c.l.b16 %v329
    %v418 = vunpack.c.h.b16 %v329
    %v419 = vunpack.c.l.b16 %v330
    %v420 = vunpack.c.h.b16 %v330
    %v421 = vunpack.c.l.b16 %v331
    %v422 = vunpack.c.h.b16 %v331
    %v423 = vunpack.c.l.b16 %v332
    %v424 = vunpack.c.h.b16 %v332
    %v425 = vunpack.c.l.b16 %v333
    %v426 = vunpack.c.h.b16 %v333
    %v427 = vunpack.c.l.b16 %v334
    %v428 = vunpack.c.h.b16 %v334
    %v429 = vunpack.c.l.b16 %v335
    %v430 = vunpack.c.h.b16 %v335
    %v431 = vunpack.c.l.b16 %v336
    %v432 = vunpack.c.h.b16 %v336
    %v433 = vunpack.c.l.b16 %v337
    %v434 = vunpack.c.h.b16 %v337
    %v435 = vunpack.c.l.b16 %v338
    %v436 = vunpack.c.h.b16 %v338
    %v437 = vunpack.c.l.b16 %v339
    %v438 = vunpack.c.h.b16 %v339
    %v439 = vunpack.c.l.b16 %v340
    %v440 = vunpack.c.h.b16 %v340
    %v441 = vunpack.c.l.b16 %v341
    %v442 = vunpack.c.h.b16 %v341
    %v443 = vunpack.c.l.b16 %v342
    %v444 = vunpack.c.h.b16 %v342
    %v445 = vunpack.c.l.b16 %v343
    %v446 = vunpack.c.h.b16 %v343
    %v447 = vunpack.c.l.b16 %v344
    %v448 = vunpack.c.h.b16 %v344
    %v449 = vunpack.c.l.b16 %v345
    %v450 = vunpack.c.h.b16 %v345
    %v451 = vunpack.c.l.b16 %v346
    %v452 = vunpack.c.h.b16 %v346
    %v453 = vunpack.c.l.b16 %v347
    %v454 = vunpack.c.h.b16 %v347
    %v455 = vunpack.c.l.b16 %v348
    %v456 = vunpack.c.h.b16 %v348
    %v457 = vpack.c.b16 %v395, %v393
    %v458 = vpack.c.b16 %v396, %v394
    %v459 = vpack.c.b16 %v399, %v397
    %v460 = vpack.c.b16 %v400, %v398
    %v461 = vpack.c.b16 %v403, %v401
    %v462 = vpack.c.b16 %v404, %v402
    %v463 = vpack.c.b16 %v407, %v405
    %v464 = vpack.c.b16 %v408, %v406
    %v465 = vpack.c.b16 %v411, %v409
    %v466 = vpack.c.b16 %v412, %v410
    %v467 = vpack.c.b16 %v415, %v413
    %v468 = vpack.c.b16 %v416, %v414
    %v469 = vpack.c.b16 %v419, %v417
    %v470 = vpack.c.b16 %v420, %v418
    %v471 = vpack.c.b16 %v423, %v421
    %v472 = vpack.c.b16 %v424, %v422
    %v473 = vpack.c.b16 %v427, %v425
    %v474 = vpack.c.b16 %v428, %v426
    %v475 = vpack.c.b16 %v431, %v429
    %v476 = vpack.c.b16 %v432, %v430
    %v477 = vpack.c.b16 %v435, %v433
    %v478 = vpack.c.b16 %v436, %v434
    %v479 = vpack.c.b16 %v439, %v437
    %v480 = vpack.c.b16 %v440, %v438
    %v481 = vpack.c.b16 %v443, %v441
    %v482 = vpack.c.b16 %v444, %v442
    %v483 = vpack.c.b16 %v447, %v445
    %v484 = vpack.c.b16 %v448, %v446
    %v485 = vpack.c.b16 %v451, %v449
    %v486 = vpack.c.b16 %v452, %v450
    %v487 = vpack.c.b16 %v455, %v453
    %v488 = vpack.c.b16 %v456, %v454
    %521 = vmatprep.subr.bf16.mxu0 %v472
    %522 = vmatpush1.bf16.msra.mxu0 %v471
    %523 = vmatprep.subr.bf16.mxu0 %v470
    %524 = vmatpush1.bf16.msra.mxu0 %v469
    %525 = vmatprep.subr.bf16.mxu0 %v468
    %526 = vmatpush1.bf16.msra.mxu0 %v467
    %527 = vmatprep.subr.bf16.mxu0 %v466
    %528 = vmatpush1.bf16.msra.mxu0 %v465
    %529 = vmatprep.subr.bf16.mxu0 %v464
    %530 = vmatpush1.bf16.msra.mxu0 %v463
    %531 = vmatprep.subr.bf16.mxu0 %v462
    %532 = vmatpush1.bf16.msra.mxu0 %v461
    %533 = vmatprep.subr.bf16.mxu0 %v460
    %534 = vmatpush1.bf16.msra.mxu0 %v459
    %535 = vmatprep.subr.bf16.mxu0 %v458
    %536 = vmatpush1.bf16.msra.mxu0 %v457
    %537 = vmatprep.subr.bf16.mxu0 %v488
    %538 = vmatpush2.bf16.msra.mxu0 %v487
    %539 = vmatprep.subr.bf16.mxu0 %v486
    %540 = vmatpush2.bf16.msra.mxu0 %v485
    %541 = vmatprep.subr.bf16.mxu0 %v484
    %542 = vmatpush2.bf16.msra.mxu0 %v483
    %543 = vmatprep.subr.bf16.mxu0 %v482
    %544 = vmatpush2.bf16.msra.mxu0 %v481
    %545 = vmatprep.subr.bf16.mxu0 %v480
    %546 = vmatpush2.bf16.msra.mxu0 %v479
    %547 = vmatprep.subr.bf16.mxu0 %v478
    %548 = vmatpush2.bf16.msra.mxu0 %v477
    %549 = vmatprep.subr.bf16.mxu0 %v476
    %550 = vmatpush2.bf16.msra.mxu0 %v475
    %551 = vmatprep.subr.bf16.mxu0 %v474
    %552 = vmatpush2.bf16.msra.mxu0 %v473
    %553 = vmatprep.mubr.bf16.mxu0 %v316
    %554 = vmatmul.mubr.bf16.gmra.mxu0 %v315
    %v555 = vpop.f32.mrf.mxu0
    %v556 = vadd.f32 %v354, %v555
    %v557 = vpop.f32.mrf.mxu0
    %v558 = vadd.f32 %v358, %v557
    %v559 = vpop.f32.mrf.mxu0
    %v560 = vpop.f32.mrf.mxu0
    %561 = vdwg.mxu0
    %v562 = vmax.f32 %v556, 0.0
    %v563 = vmax.f32 %v558, 0.0
    %564 = vst [vmem:[#allocation8] sm:$0xff] %v562
    %565 = vst [vmem:[#allocation8 + $0x8] sm:$0xff] %v563
    // Predicated region
    $region34: #{tpu_custom_call.1} parent=1 // pred_check
      _
    $region35: #{tpu_custom_call.1} parent=1 // pred_check_branch
      %567 = sbr.rel (0) target = $region37
    $region36: #{tpu_custom_call.1} parent=1 // pred_region
      %s569 = ssub.s32 256, 256
      %570 = vsyncadd [#allocation4], %s569
      %s572 = sshll.u32 [#allocation8], 4
      %s573 = int_to_ptr.vmem [resolvable:$true] %s572
      %575 = dma.vmem_to_hbm [thread:$0]  %s573, 256, %s5, [#allocation4]
    $region37: #{tpu_custom_call.1} parent=1 // pred_fallthru
      _
    // Predicated region
    $region38: #{tpu_custom_call.1} parent=1 // pred_check
      _
    $region39: #{tpu_custom_call.1} parent=1 // pred_check_branch
      %577 = sbr.rel (0) target = $region41
    $region40: #{tpu_custom_call.1} parent=1 // pred_region
      %578 = dma.done [#allocation4], 256
    $region41: #{tpu_custom_call.1} parent=1 // pred_fallthru
      _
    %579 = vsyncpa [#allocation3], 1
    %580 = vsyncpa [#allocation6], 1
    %581 = vsyncpa [#allocation4], 1

</llo_original>
